<compile_context>
chip_gen: v7x
topology: tpu7x:2x2x1
jax: 0.10.0
libtpu: 0.0.40
codegen_flags: <defaults>
</compile_context>

<pallas_src>
import functools

import jax
import jax.numpy as jnp
from jax.experimental import pallas as pl
from jax.experimental.pallas import tpu as pltpu


LANE = 128


def _round_up(x, m):
    return ((x + m - 1) // m) * m


@functools.lru_cache(maxsize=None)
def _vmem_budget_bytes():
    """~75% of this generation's per-core VMEM (v7x: 64 MiB, v5e/v6e: 128 MiB)."""
    cap = 64 * 1024 * 1024  # conservative fallback (v7x per-TC)
    try:
        info = pltpu.get_tpu_info()
        cap = int(getattr(info, "vmem_capacity_bytes", cap)) or cap
    except Exception:
        pass
    return int(cap * 3 // 4)


def _pick_row_tile(n_pad):
    """Largest row tile <= 512 that divides n_pad with >= 2 row blocks.

    >= 2 blocks keeps the "parallel" grid axis shardable across both v7x
    TensorCores even for small graphs.
    """
    for cand in (512, 384, 256, 128, 64, 32, 16, 8):
        if n_pad % cand == 0 and n_pad // cand >= 2:
            return cand
    return n_pad


def _pick_reduction_tile(total, budget, fixed_bytes, per_tk_bytes, cap):
    """Largest 128-multiple divisor of `total` (<= cap) fitting the VMEM budget."""
    best = min(total, LANE)
    cand = LANE
    top = min(cap, total)
    while cand <= top:
        if total % cand == 0 and fixed_bytes + per_tk_bytes * cand <= budget:
            best = cand
        cand += LANE
    return best


# ----------------------------- Pallas kernels --------------------------------
def _transform_kernel(x_ref, w_ref, o_ref, acc_ref):
    # XW tile: (tm, tk) @ (tk, F_out_pad), f32 accumulation over the k axis.
    k = pl.program_id(1)

    @pl.when(k == 0)
    def _():
        acc_ref[...] = jnp.zeros_like(acc_ref)

    acc_ref[...] += jnp.dot(
        x_ref[...], w_ref[...], preferred_element_type=jnp.float32
    )

    @pl.when(k == pl.num_programs(1) - 1)
    def _():
        o_ref[...] = acc_ref[...].astype(o_ref.dtype)


def _aggregate_kernel_resident(a_ref, xw_ref, b_ref, o_ref, acc_ref, *, tk,
                               apply_relu):
    # out = A_hat @ XW + b (+ ReLU); XW is the full (n_pad, F) array resident
    # in VMEM (constant block index => DMA'd once), sliced per reduction step.
    k = pl.program_id(1)

    @pl.when(k == 0)
    def _():
        acc_ref[...] = jnp.zeros_like(acc_ref)

    start = pl.multiple_of(k * tk, LANE)
    xw_blk = xw_ref[pl.ds(start, tk), :]
    acc_ref[...] += jnp.dot(
        a_ref[...], xw_blk, preferred_element_type=jnp.float32
    )

    @pl.when(k == pl.num_programs(1) - 1)
    def _():
        h = acc_ref[...] + b_ref[...]
        if apply_relu:
            h = jnp.maximum(h, 0.0)
        o_ref[...] = h.astype(o_ref.dtype)


def _aggregate_kernel_streamed(a_ref, xw_ref, b_ref, o_ref, acc_ref, *,
                               apply_relu):
    # Fallback when XW is too large to keep resident: XW streamed per k block.
    k = pl.program_id(1)

    @pl.when(k == 0)
    def _():
        acc_ref[...] = jnp.zeros_like(acc_ref)

    acc_ref[...] += jnp.dot(
        a_ref[...], xw_ref[...], preferred_element_type=jnp.float32
    )

    @pl.when(k == pl.num_programs(1) - 1)
    def _():
        h = acc_ref[...] + b_ref[...]
        if apply_relu:
            h = jnp.maximum(h, 0.0)
        o_ref[...] = h.astype(o_ref.dtype)


# ----------------------------- Pallas wrappers --------------------------------
def _transform(x_pad, w_pad):
    n_pad, f_in_pad = x_pad.shape
    f_out_pad = w_pad.shape[1]
    budget = _vmem_budget_bytes()
    tm = _pick_row_tile(n_pad)

    fixed = (tm * f_out_pad * 4          # f32 accumulator
             + 2 * tm * f_out_pad * 2)   # out double buffer (bf16)
    per_tk = 2 * (tm + f_out_pad) * 2    # X + W double buffers (bf16)
    tk = _pick_reduction_tile(f_in_pad, budget, fixed, per_tk, cap=2048)

    cost = pl.CostEstimate(
        flops=2 * n_pad * f_in_pad * f_out_pad,
        transcendentals=0,
        bytes_accessed=(n_pad * f_in_pad * 2
                        + f_in_pad * f_out_pad * 2 * (n_pad // tm)
                        + n_pad * f_out_pad * 2),
    )
    return pl.pallas_call(
        _transform_kernel,
        out_shape=jax.ShapeDtypeStruct((n_pad, f_out_pad), jnp.bfloat16),
        grid=(n_pad // tm, f_in_pad // tk),
        in_specs=[
            pl.BlockSpec((tm, tk), lambda i, k: (i, k)),
            pl.BlockSpec((tk, f_out_pad), lambda i, k: (k, 0)),
        ],
        out_specs=pl.BlockSpec((tm, f_out_pad), lambda i, k: (i, 0)),
        scratch_shapes=[pltpu.VMEM((tm, f_out_pad), jnp.float32)],
        compiler_params=pltpu.CompilerParams(
            dimension_semantics=("parallel", "arbitrary"),
            vmem_limit_bytes=budget,
        ),
        cost_estimate=cost,
    )(x_pad, w_pad)


def _aggregate(a_pad, xw_pad, b_pad, *, apply_relu, out_dtype):
    n_pad = a_pad.shape[0]
    f_out_pad = xw_pad.shape[1]
    out_isz = jnp.dtype(out_dtype).itemsize
    budget = _vmem_budget_bytes()
    tm = _pick_row_tile(n_pad)

    xw_bytes = n_pad * f_out_pad * 2
    # Keep XW fully resident in VMEM when it fits comfortably (count possible
    # double buffering conservatively); otherwise stream (tk, F) blocks.
    resident_xw = 2 * xw_bytes <= budget // 3

    fixed = (tm * f_out_pad * 4                 # f32 accumulator
             + 2 * tm * f_out_pad * out_isz     # out double buffer
             + 2 * f_out_pad * 4)               # bias
    if resident_xw:
        fixed += 2 * xw_bytes
        per_tk = 2 * tm * 2                     # only the A_hat double buffer grows
    else:
        per_tk = 2 * tm * 2 + 2 * f_out_pad * 2
    tk = _pick_reduction_tile(n_pad, budget, fixed, per_tk, cap=4096)

    b2d = b_pad.reshape(1, f_out_pad)
    if resident_xw:
        kernel = functools.partial(
            _aggregate_kernel_resident, tk=tk, apply_relu=apply_relu)
        xw_spec = pl.BlockSpec((n_pad, f_out_pad), lambda i, k: (0, 0))
        xw_traffic = xw_bytes                        # loaded once
    else:
        kernel = functools.partial(
            _aggregate_kernel_streamed, apply_relu=apply_relu)
        xw_spec = pl.BlockSpec((tk, f_out_pad), lambda i, k: (k, 0))
        xw_traffic = xw_bytes * (n_pad // tm)        # re-read per row block

    cost = pl.CostEstimate(
        flops=2 * n_pad * n_pad * f_out_pad,
        transcendentals=0,
        bytes_accessed=(n_pad * n_pad * 2 + xw_traffic + b2d.size * 4
                        + n_pad * f_out_pad * out_isz),
    )
    return pl.pallas_call(
        kernel,
        out_shape=jax.ShapeDtypeStruct((n_pad, f_out_pad), out_dtype),
        grid=(n_pad // tm, n_pad // tk),
        in_specs=[
            pl.BlockSpec((tm, tk), lambda i, k: (i, k)),
            xw_spec,
            pl.BlockSpec((1, f_out_pad), lambda i, k: (0, 0)),
        ],
        out_specs=pl.BlockSpec((tm, f_out_pad), lambda i, k: (i, 0)),
        scratch_shapes=[pltpu.VMEM((tm, f_out_pad), jnp.float32)],
        compiler_params=pltpu.CompilerParams(
            dimension_semantics=("parallel", "arbitrary"),
            vmem_limit_bytes=budget,
        ),
        cost_estimate=cost,
    )(a_pad, xw_pad, b2d)


def gcn_layer(a_pad, x_pad, w_pad, b_pad, *, apply_relu, out_dtype):
    """One GCNConv layer: relu_opt(A_hat @ (x @ w) + b) on padded operands."""
    xw = _transform(x_pad, w_pad)
    return _aggregate(a_pad, xw, b_pad, apply_relu=apply_relu, out_dtype=out_dtype)


# ------------------------------- JAX glue -------------------------------------
def build_norm_adj_padded(edge_index, num_nodes, n_pad):
    """D^{-1/2}(A+I)D^{-1/2}, built directly at padded shape, cast to bf16.

    Duplicate edges accumulate (scatter-add), matching PyG GCNConv aggregation;
    self loops (unit weight) are added only for real nodes, so padded rows and
    columns are exactly zero.
    """
    src, dst = edge_index[0], edge_index[1]
    idx = jnp.arange(num_nodes)
    adj = (jnp.zeros((n_pad, n_pad), jnp.float32)
           .at[dst, src].add(1.0)
           .at[idx, idx].add(1.0))
    deg = adj.sum(axis=1)
    d_inv_sqrt = jnp.where(deg > 0, jax.lax.rsqrt(deg), 0.0)
    # normalize + bf16-cast fuse into a single pass over the f32 buffer
    return (d_inv_sqrt[:, None] * adj * d_inv_sqrt[None, :]).astype(jnp.bfloat16)


def _pad2d(a, rows, cols, dtype):
    out = jnp.zeros((rows, cols), dtype)
    return out.at[: a.shape[0], : a.shape[1]].set(a.astype(dtype))


def glorot(key, shape):
    fan_in, fan_out = shape
    limit = jnp.sqrt(6.0 / (fan_in + fan_out))
    return jax.random.uniform(key, shape, jnp.float32, -limit, limit)


def init_gcn_params(key, input_dim, hidden_dim, output_dim):
    k1, k2 = jax.random.split(key)
    return {
        "w1": glorot(k1, (input_dim, hidden_dim)),
        "b1": jnp.zeros((hidden_dim,), jnp.float32),
        "w2": glorot(k2, (hidden_dim, output_dim)),
        "b2": jnp.zeros((output_dim,), jnp.float32),
    }


def gcn_forward(params, x, edge_index):
    n, f_in = x.shape
    hidden = params["w1"].shape[1]
    f_out = params["w2"].shape[1]

    # 128-multiple padding only (no 512-multiple blow-up).
    n_pad = _round_up(n, LANE)
    f_in_pad = _round_up(f_in, LANE)
    h_pad = _round_up(hidden, LANE)
    f_out_pad = _round_up(f_out, LANE)

    # bf16 HBM streams (deliberate precision tradeoff; f32 accumulation in-kernel).
    a_pad = build_norm_adj_padded(edge_index, n, n_pad)
    x_pad = _pad2d(x, n_pad, f_in_pad, jnp.bfloat16)
    w1 = _pad2d(params["w1"], f_in_pad, h_pad, jnp.bfloat16)
    w2 = _pad2d(params["w2"], h_pad, f_out_pad, jnp.bfloat16)
    b1 = jnp.zeros((h_pad,), jnp.float32).at[:hidden].set(params["b1"])
    b2 = jnp.zeros((f_out_pad,), jnp.float32).at[:f_out].set(params["b2"])

    h1 = gcn_layer(a_pad, x_pad, w1, b1, apply_relu=True, out_dtype=jnp.bfloat16)
    out = gcn_layer(a_pad, h1, w2, b2, apply_relu=False, out_dtype=jnp.float32)
    return out[:n, :f_out]


def gcn_forward_ref(params, x, edge_index):
    """Pure-JAX f32 reference for correctness checking."""
    n = x.shape[0]
    src, dst = edge_index[0], edge_index[1]
    adj = jnp.zeros((n, n), jnp.float32).at[dst, src].add(1.0) + jnp.eye(n)
    deg = adj.sum(axis=1)
    d_inv_sqrt = jnp.where(deg > 0, jax.lax.rsqrt(deg), 0.0)
    a_hat = d_inv_sqrt[:, None] * adj * d_inv_sqrt[None, :]
    h = jnp.maximum(a_hat @ (x @ params["w1"]) + params["b1"], 0.0)
    return a_hat @ (h @ params["w2"]) + params["b2"]


# ------------------------------ demo / test -----------------------------------
if __name__ == "__main__":
    key = jax.random.PRNGKey(0)
    k_feat, k_edge, k_param = jax.random.split(key, 3)

    num_nodes = 16
    input_dim = 8
    hidden_dim = 32
    output_dim = 4
    num_edges = 40

    # node features: (N, F_in)
    x = jax.random.normal(k_feat, (num_nodes, input_dim), jnp.float32)
    # edge_index: (2, E), random directed edges
    edge_index = jax.random.randint(k_edge, (2, num_edges), 0, num_nodes)

    params = init_gcn_params(k_param, input_dim, hidden_dim, output_dim)

    out = gcn_forward(params, x, edge_index)
    jax.block_until_ready(out)

    assert out.shape == (num_nodes, output_dim)
    assert out.dtype == jnp.float32

    # correctness vs f32 reference (bf16 streams => modest tolerance)
    ref = gcn_forward_ref(params, x, edge_index)
    assert jnp.allclose(out, ref, rtol=5e-2, atol=5e-2), (
        float(jnp.max(jnp.abs(out - ref)))
    )
    print("KERNEL_OK")
</pallas_src>

<mosaic_0001>
module attributes {stable_mosaic.version = 11 : i64} {
  func.func @_transform_kernel(%arg0: i32, %arg1: i32, %arg2: memref<64x128xbf16, #tpu.memory_space<vmem>>, %arg3: memref<128x128xbf16, #tpu.memory_space<vmem>>, %arg4: memref<64x128xbf16, #tpu.memory_space<vmem>>, %arg5: memref<64x128xf32, #tpu.memory_space<vmem>>) attributes {dimension_semantics = [#tpu.dimension_semantics<parallel>, #tpu.dimension_semantics<arbitrary>], iteration_bounds = array<i64: 2, 1>, scalar_prefetch = 0 : i64, scratch_operands = 1 : i64, tpu.core_type = #tpu.core_type<tc>, window_params = [{transform_indices = @transform_0, window_bounds = array<i64: 64, 128>}, {transform_indices = @transform_1, window_bounds = array<i64: 128, 128>}, {transform_indices = @transform_2, window_bounds = array<i64: 64, 128>}]} {
    %c0_i32 = arith.constant 0 : i32
    %0 = arith.cmpi eq, %arg1, %c0_i32 : i32
    %1 = arith.extui %0 : i1 to i32
    %c0_i32_0 = arith.constant 0 : i32
    %2 = arith.cmpi ne, %1, %c0_i32_0 : i32
    scf.if %2 {
      %cst_10 = arith.constant 0.000000e+00 : f32
      %12 = vector.broadcast %cst_10 : f32 to vector<64x128xf32>
      %c0_11 = arith.constant 0 : index
      %c0_12 = arith.constant 0 : index
      %13 = vector.load %arg5[%c0_11, %c0_12] : memref<64x128xf32, #tpu.memory_space<vmem>>, vector<64x128xf32>
      tpu.vector_store %arg5[%c0_11, %c0_12], %12 {strides = array<i32>} : memref<64x128xf32, #tpu.memory_space<vmem>>, vector<64x128xf32>,
    } else {
    }
    %c0 = arith.constant 0 : index
    %c0_1 = arith.constant 0 : index
    %3 = vector.load %arg5[%c0, %c0_1] : memref<64x128xf32, #tpu.memory_space<vmem>>, vector<64x128xf32>
    %c0_2 = arith.constant 0 : index
    %c0_3 = arith.constant 0 : index
    %4 = vector.load %arg2[%c0_2, %c0_3] : memref<64x128xbf16, #tpu.memory_space<vmem>>, vector<64x128xbf16>
    %c0_4 = arith.constant 0 : index
    %c0_5 = arith.constant 0 : index
    %5 = vector.load %arg3[%c0_4, %c0_5] : memref<128x128xbf16, #tpu.memory_space<vmem>>, vector<128x128xbf16>
    %cst = arith.constant dense<0.000000e+00> : vector<64x128xf32>
    %6 = tpu.matmul %4, %5, %cst {dimension_numbers = #tpu.dot_dimension_numbers<[1], [0], [0], [1], [0, 0, 1, 1], [], []>} : vector<64x128xbf16>, vector<128x128xbf16>, vector<64x128xf32> -> vector<64x128xf32>
    %7 = arith.addf %3, %6 : vector<64x128xf32>
    %c0_6 = arith.constant 0 : index
    %c0_7 = arith.constant 0 : index
    %8 = vector.load %arg5[%c0_6, %c0_7] : memref<64x128xf32, #tpu.memory_space<vmem>>, vector<64x128xf32>
    tpu.vector_store %arg5[%c0_6, %c0_7], %7 {strides = array<i32>} : memref<64x128xf32, #tpu.memory_space<vmem>>, vector<64x128xf32>,
    %c0_i32_8 = arith.constant 0 : i32
    %9 = arith.cmpi eq, %arg1, %c0_i32_8 : i32
    %10 = arith.extui %9 : i1 to i32
    %c0_i32_9 = arith.constant 0 : i32
    %11 = arith.cmpi ne, %10, %c0_i32_9 : i32
    scf.if %11 {
      %c0_10 = arith.constant 0 : index
      %c0_11 = arith.constant 0 : index
      %12 = vector.load %arg5[%c0_10, %c0_11] : memref<64x128xf32, #tpu.memory_space<vmem>>, vector<64x128xf32>
      %13 = arith.truncf %12 : vector<64x128xf32> to vector<64x128xbf16>
      %c0_12 = arith.constant 0 : index
      %c0_13 = arith.constant 0 : index
      %14 = vector.load %arg4[%c0_12, %c0_13] : memref<64x128xbf16, #tpu.memory_space<vmem>>, vector<64x128xbf16>
      tpu.vector_store %arg4[%c0_12, %c0_13], %13 {strides = array<i32>} : memref<64x128xbf16, #tpu.memory_space<vmem>>, vector<64x128xbf16>,
    } else {
    }
    return
  }
  func.func @transform_0(%arg0: i32, %arg1: i32) -> (i32, i32) {
    %c0_i32 = arith.constant 0 : i32
    return %arg0, %arg1 : i32, i32
  }
  func.func @transform_1(%arg0: i32, %arg1: i32) -> (i32, i32) {
    %c0_i32 = arith.constant 0 : i32
    %c0_i32_0 = arith.constant 0 : i32
    return %arg1, %c0_i32 : i32, i32
  }
  func.func @transform_2(%arg0: i32, %arg1: i32) -> (i32, i32) {
    %c0_i32 = arith.constant 0 : i32
    %c0_i32_0 = arith.constant 0 : i32
    return %arg0, %c0_i32 : i32, i32
  }
}

</mosaic_0001>

<llo_original>
// kernel: tpu_custom_call.1
$region0: #{tpu_custom_call.1}
  #allocation0 [shape = 'u32[]', space=smem, size = 0x4, offset = 0x4, fixed_abs, tag = 'smem constant byte address 0x4 - core index']
  #allocation1 [shape = 'u32[144,128]{1,0:T(1,128)}', space=vmem, size = 0x12000, scoped, tag = 'internal scratch']
  #allocation2 [shape = 'f32[64,128]{1,0:T(8,128)}', space=vmem, size = 0x8000, scoped, tag = 'scratch operand']
  %s0 = inlined_call_operand.hbm [shape: bf16[128,128], index: 0, kind: input, shape index: {}]
  %s1 = inlined_call_operand.hbm [shape: bf16[128,128], index: 1, kind: input, shape index: {}]
  %s2 = inlined_call_operand.hbm [shape: bf16[128,128], index: 2, kind: output, shape index: {}]
  %s3 = sld [smem:[#allocation0]]
  $region57: #{tpu_custom_call.1} parent=0
    _
  %s5 = ssub.s32 1, %s3
  %s6 = scalar_select 0, %s5, %s3
  $region1: #{tpu_custom_call.1} parent=0
    #allocation3 [shape = 'u8[32768]{0}', space=vmem, size = 0x8000, scoped, tag = 'input window, operand 0']
    #allocation4 [shape = 's32[2]{0}', space=sflag, size = 0x8, scoped, tag = 'scoped memory for tpu_custom_call.1']
    #allocation5 [shape = 's32[2]{0}', space=sflag, size = 0x8, scoped, tag = 'scoped memory for tpu_custom_call.1']
    #allocation6 [shape = 'u8[32768]{0}', space=vmem, size = 0x8000, scoped, tag = 'input window, operand 1, single buffered']
    #allocation7 [shape = 's32[1]{0}', space=sflag, size = 0x4, scoped, tag = 'scoped memory for tpu_custom_call.1']
    #allocation8 [shape = 'u8[32768]{0}', space=vmem, size = 0x8000, scoped, tag = 'output window, operand 0']
    %7 = vsyncpa [#allocation4], 0
    %s8 = scalar_lea.sflag [#allocation4], 1
    %9 = vsyncpa %s8, 0
    %10 = vsyncpa [#allocation7], 0
    %11 = vsyncpa [#allocation5], 0
    %s12 = scalar_lea.sflag [#allocation5], 1
    %13 = vsyncpa %s12, 0
    loop: start=0, step=1, limit=4
    $region2: #{tpu_custom_call.1} parent=1 // loop_pre_header
      _
    $region3: #{tpu_custom_call.1} parent=1 // loop_header
      %s15 = sphi 0, %s19
      %p16 = scmp.ge.s32.totalorder %s15, 4
      %s22 = sphi 0, %s34
      %s23 = sphi 0, %s30
      %s24 = sphi 0, %s22
      %s25 = sphi 0, %s23
      %s26 = sphi 0, %s24
      %s27 = sphi 0, %s25
      %s39 = sphi 0, %s41
      %s42 = sphi 0, %s39
      %s43 = sphi 0, %s42
      %s59 = sphi 0, %s43
      %s65 = sphi 0, %s67
      %s68 = sphi 0, %s65
      %s69 = sphi 0, %s68
      %s85 = sphi 0, %s69
      %s91 = sphi 0, %s93
      %s94 = sphi 0, %s91
      %s95 = sphi 0, %s94
      %s111 = sphi 0, %s95
    $region4: #{tpu_custom_call.1} parent=1 // loop_header_branch
      %18 = sbr.rel (%p16) target = $region8
    $region5: #{tpu_custom_call.1} parent=1 // loop_body
      %s20 = ssub.s32 %s15, 1
      %s21 = ssub.s32 %s15, 2
      %s28 = sadd.s32 1, %s23
      %p29 = scmp.ge.s32.totalorder %s28, 1
      %s30 = scalar_select %p29, 0, %s28
      %s31 = sadd.s32 1, %s22
      %s32 = scalar_select %p29, %s31, %s22
      %p33 = scmp.ge.s32.totalorder %s32, 2
      %s34 = scalar_select %p33, 0, %s32
      %s35 = ssub.s32 %s22, %s34
      %s36 = ssub.s32 %s23, %s30
      %s37 = sor.u32 %s35, %s36
      %p38 = scmp.eq.s32.totalorder %s37, 0
      %s40 = sadd.s32 %s39, 1
      %s41 = scalar_select %p38, %s39, %s40
      %p44 = pneg %p38
      %p45 = scmp.eq.s32.totalorder %s15, 1
      %p46 = por %p44, %p45
      %p47 = scmp.ne.s32.totalorder %s39, %s42
      %p48 = scmp.eq.s32.totalorder %s15, 0
      %p49 = por %p47, %p48
      %p50 = scmp.ne.s32.totalorder %s39, %s42
      %p51 = scmp.eq.s32.totalorder %s20, 1
      %p52 = por %p50, %p51
      %p53 = scmp.ne.s32.totalorder %s42, %s43
      %p54 = scmp.eq.s32.totalorder %s20, 0
      %p55 = por %p53, %p54
      %p56 = scmp.ne.s32.totalorder %s42, %s43
      %p57 = scmp.eq.s32.totalorder %s21, 1
      %p58 = por %p56, %p57
      %p60 = scmp.ne.s32.totalorder %s43, %s59
      %p61 = scmp.eq.s32.totalorder %s21, 0
      %p62 = por %p60, %p61
      %s63 = ssub.s32 %s23, %s30
      %p64 = scmp.eq.s32.totalorder %s63, 0
      %s66 = sadd.s32 %s65, 1
      %s67 = scalar_select %p64, %s65, %s66
      %p70 = pneg %p64
      %p71 = scmp.eq.s32.totalorder %s15, 1
      %p72 = por %p70, %p71
      %p73 = scmp.ne.s32.totalorder %s65, %s68
      %p74 = scmp.eq.s32.totalorder %s15, 0
      %p75 = por %p73, %p74
      %p76 = scmp.ne.s32.totalorder %s65, %s68
      %p77 = scmp.eq.s32.totalorder %s20, 1
      %p78 = por %p76, %p77
      %p79 = scmp.ne.s32.totalorder %s68, %s69
      %p80 = scmp.eq.s32.totalorder %s20, 0
      %p81 = por %p79, %p80
      %p82 = scmp.ne.s32.totalorder %s68, %s69
      %p83 = scmp.eq.s32.totalorder %s21, 1
      %p84 = por %p82, %p83
      %p86 = scmp.ne.s32.totalorder %s69, %s85
      %p87 = scmp.eq.s32.totalorder %s21, 0
      %p88 = por %p86, %p87
      %s89 = ssub.s32 %s22, %s34
      %p90 = scmp.eq.s32.totalorder %s89, 0
      %s92 = sadd.s32 %s91, 1
      %s93 = scalar_select %p90, %s91, %s92
      %p96 = pneg %p90
      %p97 = scmp.eq.s32.totalorder %s15, 1
      %p98 = por %p96, %p97
      %p99 = scmp.ne.s32.totalorder %s91, %s94
      %p100 = scmp.eq.s32.totalorder %s15, 0
      %p101 = por %p99, %p100
      %p102 = scmp.ne.s32.totalorder %s91, %s94
      %p103 = scmp.eq.s32.totalorder %s20, 1
      %p104 = por %p102, %p103
      %p105 = scmp.ne.s32.totalorder %s94, %s95
      %p106 = scmp.eq.s32.totalorder %s20, 0
      %p107 = por %p105, %p106
      %p108 = scmp.ne.s32.totalorder %s94, %s95
      %p109 = scmp.eq.s32.totalorder %s21, 1
      %p110 = por %p108, %p109
      %p112 = scmp.ne.s32.totalorder %s95, %s111
      %p113 = scmp.eq.s32.totalorder %s21, 0
      %p114 = por %p112, %p113
      %p115 = scmp.le.s32.totalorder 1, %s15
      %p116 = scmp.lt.s32.totalorder %s15, 3
      %p117 = pnand %p115, %p116
      %p118 = pneg %p117
      // Predicated region
      $region9: #{tpu_custom_call.1} parent=5 // pred_check
        _
      $region10: #{tpu_custom_call.1} parent=5 // pred_check_branch
        %120 = sbr.rel (%p117) target = $region12
      $region11: #{tpu_custom_call.1} parent=5 // pred_region
        %s121 = ssub.s32 %s15, 1
        // Predicated region
        $region13: #{tpu_custom_call.1} parent=11 // pred_check
          %p122 = pneg %p81
        $region14: #{tpu_custom_call.1} parent=11 // pred_check_branch
          %124 = sbr.rel (%p122) target = $region16
        $region15: #{tpu_custom_call.1} parent=11 // pred_region
          %s125 = smul.u32 16, %s25
          %s127 = ssub.s32 1024, 1024
          %128 = vsyncadd [#allocation7], %s127
          %s129 = smul.addr %s125, 64
          %s130 = scalar_lea.hbm %s1, %s129
          %s131 = sshll.u32 [#allocation6], 4
          %s132 = int_to_ptr.vmem [resolvable:$true] %s131
          %137 = dma.hbm_to_vmem [thread:$0]  %s130, 1024, %s132, [#allocation7], 64, 64, 4
        $region16: #{tpu_custom_call.1} parent=11 // pred_fallthru
          _
      $region12: #{tpu_custom_call.1} parent=5 // pred_fallthru
        _
      %p138 = scmp.lt.s32.totalorder %s15, 2
      // Predicated region
      $region17: #{tpu_custom_call.1} parent=5 // pred_check
        %p139 = pneg %p138
      $region18: #{tpu_custom_call.1} parent=5 // pred_check_branch
        %141 = sbr.rel (%p139) target = $region20
      $region19: #{tpu_custom_call.1} parent=5 // pred_region
        // Predicated region
        $region21: #{tpu_custom_call.1} parent=19 // pred_check
          %p142 = pneg %p49
        $region22: #{tpu_custom_call.1} parent=19 // pred_check_branch
          %144 = sbr.rel (%p142) target = $region24
        $region23: #{tpu_custom_call.1} parent=19 // pred_region
          %s145 = sand.u32 %s39, 1
          %s146 = scalar_lea.sflag [#allocation4], %s145
          %s147 = sand.u32 %s39, 1
          %s148 = smul.addr %s147, 32
          %s149 = scalar_lea.vmem [#allocation3], %s148
          %s150 = smul.u32 8, %s22
          %s152 = ssub.s32 512, 512
          %153 = vsyncadd %s146, %s152
          %s154 = sadd.s32 %s23, %s150
          %s155 = smul.addr %s154, 64
          %s156 = scalar_lea.hbm %s0, %s155
          %s157 = sshll.u32 %s149, 4
          %s158 = int_to_ptr.vmem [resolvable:$true] %s157
          %163 = dma.hbm_to_vmem [thread:$0]  %s156, 512, %s158, %s146, 64, 64, 4
        $region24: #{tpu_custom_call.1} parent=19 // pred_fallthru
          _
      $region20: #{tpu_custom_call.1} parent=5 // pred_fallthru
        _
      %p164 = scmp.le.s32.totalorder 1, %s15
      %p165 = scmp.lt.s32.totalorder %s15, 3
      %p166 = pnand %p164, %p165
      %p167 = pneg %p166
      // Predicated region
      $region25: #{tpu_custom_call.1} parent=5 // pred_check
        _
      $region26: #{tpu_custom_call.1} parent=5 // pred_check_branch
        %169 = sbr.rel (%p166) target = $region28
      $region27: #{tpu_custom_call.1} parent=5 // pred_region
        %s170 = ssub.s32 %s15, 1
        %s171 = sand.u32 %s42, 1
        %s172 = scalar_lea.sflag [#allocation4], %s171
        %s173 = sand.u32 %s42, 1
        %s174 = smul.addr %s173, 32
        %s175 = scalar_lea.vmem [#allocation3], %s174
        // Predicated region
        $region29: #{tpu_custom_call.1} parent=27 // pred_check
          %p176 = pneg %p55
        $region30: #{tpu_custom_call.1} parent=27 // pred_check_branch
          %178 = sbr.rel (%p176) target = $region32
        $region31: #{tpu_custom_call.1} parent=27 // pred_region
          %179 = dma.done %s172, 512
        $region32: #{tpu_custom_call.1} parent=27 // pred_fallthru
          _
        // Predicated region
        $region33: #{tpu_custom_call.1} parent=27 // pred_check
          %p180 = pneg %p81
        $region34: #{tpu_custom_call.1} parent=27 // pred_check_branch
          %182 = sbr.rel (%p180) target = $region36
        $region35: #{tpu_custom_call.1} parent=27 // pred_region
          %183 = dma.done [#allocation7], 1024
        $region36: #{tpu_custom_call.1} parent=27 // pred_fallthru
          _
        %s184 = sand.u32 %s42, 1
        %s185 = scalar_lea.sflag [#allocation4], %s184
        %s186 = sand.u32 %s42, 1
        %s187 = smul.addr %s186, 32
        %s188 = scalar_lea.vmem [#allocation3], %s187
        %p189 = pneg %p55
        %p190 = pneg %p52
        %p191 = pneg %p81
        %p192 = pneg %p78
        %p193 = pneg %p107
        %p194 = pneg %p104
        %s195 = sand.u32 %s94, 1
        %s196 = scalar_lea.sflag [#allocation5], %s195
        %s197 = sand.u32 %s94, 1
        %s198 = smul.addr %s197, 32
        %s199 = scalar_lea.vmem [#allocation8], %s198
        %s200 = smul.u32 8, %s24
        %s201 = smul.u32 16, %s25
        %s202 = smul.u32 8, %s24
        %p204 = scmp.eq.s32.totalorder %s25, 0
        // Predicated region
        $region37: #{tpu_custom_call.1} parent=27 // pred_check
          %p205 = pneg %p204
        $region38: #{tpu_custom_call.1} parent=27 // pred_check_branch
          %207 = sbr.rel (%p205) target = $region40
        $region39: #{tpu_custom_call.1} parent=27 // pred_region
          %208 = vst [vmem:[#allocation2] sm:$0xff] 0.0
          %209 = vst [vmem:[#allocation2 + $0x8] sm:$0xff] 0.0
          %210 = vst [vmem:[#allocation2 + $0x10] sm:$0xff] 0.0
          %211 = vst [vmem:[#allocation2 + $0x18] sm:$0xff] 0.0
          %212 = vst [vmem:[#allocation2 + $0x20] sm:$0xff] 0.0
          %213 = vst [vmem:[#allocation2 + $0x28] sm:$0xff] 0.0
          %214 = vst [vmem:[#allocation2 + $0x30] sm:$0xff] 0.0
          %215 = vst [vmem:[#allocation2 + $0x38] sm:$0xff] 0.0
        $region40: #{tpu_custom_call.1} parent=27 // pred_fallthru
          _
        %v216 = vld [vmem:[#allocation2] sm:$0xff]
        %v217 = vld [vmem:[#allocation2 + $0x8] sm:$0xff]
        %v218 = vld [vmem:[#allocation2 + $0x10] sm:$0xff]
        %v219 = vld [vmem:[#allocation2 + $0x18] sm:$0xff]
        %v220 = vld [vmem:[#allocation2 + $0x20] sm:$0xff]
        %v221 = vld [vmem:[#allocation2 + $0x28] sm:$0xff]
        %v222 = vld [vmem:[#allocation2 + $0x30] sm:$0xff]
        %v223 = vld [vmem:[#allocation2 + $0x38] sm:$0xff]
        %v224 = vld [vmem:[%s175] sm:$0xf]
        %v225 = vld [vmem:[%s175 + $0x4] sm:$0xf]
        %v226 = vld [vmem:[%s175 + $0x8] sm:$0xf]
        %v227 = vld [vmem:[%s175 + $0xc] sm:$0xf]
        %v228 = vld [vmem:[%s175 + $0x10] sm:$0xf]
        %v229 = vld [vmem:[%s175 + $0x14] sm:$0xf]
        %v230 = vld [vmem:[%s175 + $0x18] sm:$0xf]
        %v231 = vld [vmem:[%s175 + $0x1c] sm:$0xf]
        %v232 = vld [vmem:[#allocation6] sm:$0xf]
        %v233 = vld [vmem:[#allocation6 + $0x4] sm:$0xf]
        %v234 = vld [vmem:[#allocation6 + $0x8] sm:$0xf]
        %v235 = vld [vmem:[#allocation6 + $0xc] sm:$0xf]
        %v236 = vld [vmem:[#allocation6 + $0x10] sm:$0xf]
        %v237 = vld [vmem:[#allocation6 + $0x14] sm:$0xf]
        %v238 = vld [vmem:[#allocation6 + $0x18] sm:$0xf]
        %v239 = vld [vmem:[#allocation6 + $0x1c] sm:$0xf]
        %v240 = vld [vmem:[#allocation6 + $0x20] sm:$0xf]
        %v241 = vld [vmem:[#allocation6 + $0x24] sm:$0xf]
        %v242 = vld [vmem:[#allocation6 + $0x28] sm:$0xf]
        %v243 = vld [vmem:[#allocation6 + $0x2c] sm:$0xf]
        %v244 = vld [vmem:[#allocation6 + $0x30] sm:$0xf]
        %v245 = vld [vmem:[#allocation6 + $0x34] sm:$0xf]
        %v246 = vld [vmem:[#allocation6 + $0x38] sm:$0xf]
        %v247 = vld [vmem:[#allocation6 + $0x3c] sm:$0xf]
        %v256 = vunpack.c.l.b16 %v224
        %v257 = vunpack.c.l.b16 %v225
        %v258 = vunpack.c.l.b16 %v226
        %v259 = vunpack.c.l.b16 %v227
        %v260 = vunpack.c.l.b16 %v228
        %v261 = vunpack.c.l.b16 %v229
        %v262 = vunpack.c.l.b16 %v230
        %v263 = vunpack.c.l.b16 %v231
        %v264 = vpack.c.b16 %v257, %v256
        %v265 = vpack.c.b16 %v259, %v258
        %v266 = vpack.c.b16 %v261, %v260
        %v267 = vpack.c.b16 %v263, %v262
        %v288 = vunpack.c.l.b16 %v232
        %v289 = vunpack.c.l.b16 %v233
        %v290 = vunpack.c.l.b16 %v234
        %v291 = vunpack.c.l.b16 %v235
        %v292 = vunpack.c.l.b16 %v236
        %v293 = vunpack.c.l.b16 %v237
        %v294 = vunpack.c.l.b16 %v238
        %v295 = vunpack.c.l.b16 %v239
        %v296 = vunpack.c.l.b16 %v240
        %v297 = vunpack.c.l.b16 %v241
        %v298 = vunpack.c.l.b16 %v242
        %v299 = vunpack.c.l.b16 %v243
        %v300 = vunpack.c.l.b16 %v244
        %v301 = vunpack.c.l.b16 %v245
        %v302 = vunpack.c.l.b16 %v246
        %v303 = vunpack.c.l.b16 %v247
        %v304 = vpack.c.b16 %v289, %v288
        %v305 = vpack.c.b16 %v291, %v290
        %v306 = vpack.c.b16 %v293, %v292
        %v307 = vpack.c.b16 %v295, %v294
        %v308 = vpack.c.b16 %v297, %v296
        %v309 = vpack.c.b16 %v299, %v298
        %v310 = vpack.c.b16 %v301, %v300
        %v311 = vpack.c.b16 %v303, %v302
        %320 = vmatprep.subr.bf16.mxu0 0
        %321 = vmatpush1.bf16.msra.mxu0 %v304
        %322 = vmatprep.subr.bf16.mxu0 0
        %323 = vmatpush1.bf16.msra.mxu0 %v305
        %324 = vmatprep.subr.bf16.mxu0 0
        %325 = vmatpush1.bf16.msra.mxu0 %v306
        %326 = vmatprep.subr.bf16.mxu0 0
        %327 = vmatpush1.bf16.msra.mxu0 %v307
        %328 = vmatprep.subr.bf16.mxu0 0
        %329 = vmatpush1.bf16.msra.mxu0 %v308
        %330 = vmatprep.subr.bf16.mxu0 0
        %331 = vmatpush1.bf16.msra.mxu0 %v309
        %332 = vmatprep.subr.bf16.mxu0 0
        %333 = vmatpush1.bf16.msra.mxu0 %v310
        %334 = vmatprep.subr.bf16.mxu0 0
        %335 = vmatpush1.bf16.msra.mxu0 %v311
        %336 = vmatprep.subr.bf16.mxu0 0
        %337 = vmatpush1.bf16.msra.mxu0 0
        %338 = vmatprep.subr.bf16.mxu0 0
        %339 = vmatpush1.bf16.msra.mxu0 0
        %340 = vmatprep.subr.bf16.mxu0 0
        %341 = vmatpush1.bf16.msra.mxu0 0
        %342 = vmatprep.subr.bf16.mxu0 0
        %343 = vmatpush1.bf16.msra.mxu0 0
        %344 = vmatprep.subr.bf16.mxu0 0
        %345 = vmatpush1.bf16.msra.mxu0 0
        %346 = vmatprep.subr.bf16.mxu0 0
        %347 = vmatpush1.bf16.msra.mxu0 0
        %348 = vmatprep.subr.bf16.mxu0 0
        %349 = vmatpush1.bf16.msra.mxu0 0
        %350 = vmatprep.subr.bf16.mxu0 0
        %351 = vmatpush1.bf16.msra.mxu0 0
        %352 = vmatprep.mubr.bf16.mxu0 0
        %353 = vmatmul.mubr.bf16.gmra.mrb[0].mxu0 %v264
        %v354 = vpop.f32.mrb[0].mxu0
        %v355 = vadd.f32 0.0, %v354
        %v356 = vpop.f32.mrb[0].mxu0
        %v357 = vpop.f32.mrb[0].mxu0
        %v358 = vadd.f32 0.0, %v357
        %v359 = vpop.f32.mrb[0].mxu0
        %360 = vmatprep.mubr.bf16.mxu0 0
        %361 = vmatmul.mubr.bf16.gmra.mrb[0].mxu0 %v265
        %v362 = vpop.f32.mrb[0].mxu0
        %v363 = vadd.f32 0.0, %v362
        %v364 = vpop.f32.mrb[0].mxu0
        %v365 = vpop.f32.mrb[0].mxu0
        %v366 = vadd.f32 0.0, %v365
        %v367 = vpop.f32.mrb[0].mxu0
        %368 = vmatprep.mubr.bf16.mxu0 0
        %369 = vmatmul.mubr.bf16.gmra.mrb[0].mxu0 %v266
        %v370 = vpop.f32.mrb[0].mxu0
        %v371 = vadd.f32 0.0, %v370
        %v372 = vpop.f32.mrb[0].mxu0
        %v373 = vpop.f32.mrb[0].mxu0
        %v374 = vadd.f32 0.0, %v373
        %v375 = vpop.f32.mrb[0].mxu0
        %376 = vmatprep.mubr.bf16.mxu0 0
        %377 = vmatmul.mubr.bf16.gmra.mrb[0].mxu0 %v267
        %v378 = vpop.f32.mrb[0].mxu0
        %v379 = vadd.f32 0.0, %v378
        %v380 = vpop.f32.mrb[0].mxu0
        %v381 = vpop.f32.mrb[0].mxu0
        %v382 = vadd.f32 0.0, %v381
        %v383 = vpop.f32.mrb[0].mxu0
        %384 = vdwg.mxu0
        %v385 = vadd.f32 %v216, %v355
        %v386 = vadd.f32 %v217, %v358
        %v387 = vadd.f32 %v218, %v363
        %v388 = vadd.f32 %v219, %v366
        %v389 = vadd.f32 %v220, %v371
        %v390 = vadd.f32 %v221, %v374
        %v391 = vadd.f32 %v222, %v379
        %v392 = vadd.f32 %v223, %v382
        %393 = vst [vmem:[#allocation2] sm:$0xff] %v385
        %394 = vst [vmem:[#allocation2 + $0x8] sm:$0xff] %v386
        %395 = vst [vmem:[#allocation2 + $0x10] sm:$0xff] %v387
        %396 = vst [vmem:[#allocation2 + $0x18] sm:$0xff] %v388
        %397 = vst [vmem:[#allocation2 + $0x20] sm:$0xff] %v389
        %398 = vst [vmem:[#allocation2 + $0x28] sm:$0xff] %v390
        %399 = vst [vmem:[#allocation2 + $0x30] sm:$0xff] %v391
        %400 = vst [vmem:[#allocation2 + $0x38] sm:$0xff] %v392
        // Predicated region
        $region41: #{tpu_custom_call.1} parent=27 // pred_check
          %p401 = pneg %p204
        $region42: #{tpu_custom_call.1} parent=27 // pred_check_branch
          %403 = sbr.rel (%p401) target = $region44
        $region43: #{tpu_custom_call.1} parent=27 // pred_region
          %v404 = vld [vmem:[#allocation2] sm:$0xff]
          %v405 = vld [vmem:[#allocation2 + $0x8] sm:$0xff]
          %v406 = vld [vmem:[#allocation2 + $0x10] sm:$0xff]
          %v407 = vld [vmem:[#allocation2 + $0x18] sm:$0xff]
          %v408 = vld [vmem:[#allocation2 + $0x20] sm:$0xff]
          %v409 = vld [vmem:[#allocation2 + $0x28] sm:$0xff]
          %v410 = vld [vmem:[#allocation2 + $0x30] sm:$0xff]
          %v411 = vld [vmem:[#allocation2 + $0x38] sm:$0xff]
          %v412 = vpack.c.bf16 %v405, %v404
          %v413 = vpack.c.bf16 %v407, %v406
          %v414 = vpack.c.bf16 %v409, %v408
          %v415 = vpack.c.bf16 %v411, %v410
          %v420 = vunpack.c.l.b16 %v412
          %v421 = vunpack.c.h.b16 %v412
          %v422 = vunpack.c.l.b16 %v413
          %v423 = vunpack.c.h.b16 %v413
          %v424 = vunpack.c.l.b16 %v414
          %v425 = vunpack.c.h.b16 %v414
          %v426 = vunpack.c.l.b16 %v415
          %v427 = vunpack.c.h.b16 %v415
          %v428 = vpack.c.b16 %v420, %v420
          %v429 = vpack.c.b16 %v421, %v421
          %v430 = vpack.c.b16 %v422, %v422
          %v431 = vpack.c.b16 %v423, %v423
          %v432 = vpack.c.b16 %v424, %v424
          %v433 = vpack.c.b16 %v425, %v425
          %v434 = vpack.c.b16 %v426, %v426
          %v435 = vpack.c.b16 %v427, %v427
          %444 = vst [vmem:[%s199] sm:$0xf] %v428
          %445 = vst [vmem:[%s199 + $0x4] sm:$0xf] %v429
          %446 = vst [vmem:[%s199 + $0x8] sm:$0xf] %v430
          %447 = vst [vmem:[%s199 + $0xc] sm:$0xf] %v431
          %448 = vst [vmem:[%s199 + $0x10] sm:$0xf] %v432
          %449 = vst [vmem:[%s199 + $0x14] sm:$0xf] %v433
          %450 = vst [vmem:[%s199 + $0x18] sm:$0xf] %v434
          %451 = vst [vmem:[%s199 + $0x1c] sm:$0xf] %v435
        $region44: #{tpu_custom_call.1} parent=27 // pred_fallthru
          _
        %s452 = sand.u32 %s94, 1
        %s453 = scalar_lea.sflag [#allocation5], %s452
        %s454 = sand.u32 %s94, 1
        %s455 = smul.addr %s454, 32
        %s456 = scalar_lea.vmem [#allocation8], %s455
        // Predicated region
        $region45: #{tpu_custom_call.1} parent=27 // pred_check
          %p457 = pneg %p104
        $region46: #{tpu_custom_call.1} parent=27 // pred_check_branch
          %459 = sbr.rel (%p457) target = $region48
        $region47: #{tpu_custom_call.1} parent=27 // pred_region
          %s460 = smul.u32 8, %s24
          %s462 = ssub.s32 512, 512
          %463 = vsyncadd %s453, %s462
          %s464 = smul.addr %s460, 64
          %s465 = scalar_lea.hbm %s2, %s464
          %s466 = sshll.u32 %s456, 4
          %s467 = int_to_ptr.vmem [resolvable:$true] %s466
          %472 = dma.vmem_to_hbm [thread:$0]  %s467, 512, %s465, %s453, 64, 64, 4
        $region48: #{tpu_custom_call.1} parent=27 // pred_fallthru
          _
      $region28: #{tpu_custom_call.1} parent=5 // pred_fallthru
        _
      %p473 = scmp.le.s32.totalorder 2, %s15
      // Predicated region
      $region49: #{tpu_custom_call.1} parent=5 // pred_check
        %p474 = pneg %p473
      $region50: #{tpu_custom_call.1} parent=5 // pred_check_branch
        %476 = sbr.rel (%p474) target = $region52
      $region51: #{tpu_custom_call.1} parent=5 // pred_region
        %s477 = ssub.s32 %s15, 2
        // Predicated region
        $region53: #{tpu_custom_call.1} parent=51 // pred_check
          %p478 = pneg %p110
        $region54: #{tpu_custom_call.1} parent=51 // pred_check_branch
          %480 = sbr.rel (%p478) target = $region56
        $region55: #{tpu_custom_call.1} parent=51 // pred_region
          %s481 = sand.u32 %s95, 1
          %s482 = scalar_lea.sflag [#allocation5], %s481
          %s483 = sand.u32 %s95, 1
          %s484 = smul.addr %s483, 32
          %s485 = scalar_lea.vmem [#allocation8], %s484
          %486 = dma.done %s482, 512
        $region56: #{tpu_custom_call.1} parent=51 // pred_fallthru
          _
      $region52: #{tpu_custom_call.1} parent=5 // pred_fallthru
        _
    $region6: #{tpu_custom_call.1} parent=1 // loop_footer
      %s19 = sadd.s32 1, %s15
    $region7: #{tpu_custom_call.1} parent=1 // loop_footer_branch
      %14 = sbr.rel target = $region3
    $region8: #{tpu_custom_call.1} parent=1 // loop_exit
      _
    %487 = vsyncpa [#allocation4], 1
    %s488 = scalar_lea.sflag [#allocation4], 1
    %489 = vsyncpa %s488, 1
    %490 = vsyncpa [#allocation7], 1
    %491 = vsyncpa [#allocation5], 1
    %s492 = scalar_lea.sflag [#allocation5], 1
    %493 = vsyncpa %s492, 1

</llo_original>
